<compile_context>
chip_gen: v7x
topology: tpu7x:2x2x1
jax: 0.10.0
libtpu: 0.0.40
codegen_flags: <defaults>
</compile_context>

<pallas_src>
import math
from functools import partial

import jax
import jax.numpy as jnp
from jax.experimental import pallas as pl
from jax.experimental.pallas import tpu as pltpu


def _build_pe(d_model: int, max_len: int, reverse: bool = False) -> jnp.ndarray:
    """Sinusoidal positional-encoding table, shape (max_len, d_model), float32."""
    if reverse:
        position = jnp.arange(max_len - 1, -1, -1.0, dtype=jnp.float32)[:, None]
    else:
        position = jnp.arange(max_len, dtype=jnp.float32)[:, None]
    div_term = jnp.exp(
        jnp.arange(0, d_model, 2, dtype=jnp.float32) * (-math.log(10000.0) / d_model)
    )
    angles = position * div_term                      # (max_len, d_model//2)
    pe = jnp.zeros((max_len, d_model), dtype=jnp.float32)
    pe = pe.at[:, 0::2].set(jnp.sin(angles))
    pe = pe.at[:, 1::2].set(jnp.cos(angles))
    return pe


def _scaled_pe_kernel(alpha_ref, x_ref, pe_ref, o_ref):
    # alpha_ref: SMEM (1,) f32 ; x_ref: (RB, TC) x.dtype ; pe_ref: (1, TC) f32 ; o_ref: (RB, TC)
    alpha = alpha_ref[0]
    # f32 accumulation; the (1, TC) pe row broadcasts over the RB batch rows (sublane
    # broadcast on the VPU, hidden under DMA in this HBM-bound kernel); cast to the
    # output dtype only on the final store.
    o_ref[...] = (x_ref[...].astype(jnp.float32) + alpha * pe_ref[...]).astype(o_ref.dtype)


def _pick_tiles(n_rows: int, n_cols: int, itemsize: int,
                tile_budget: int = 2 * 1024 * 1024) -> tuple[int, int]:
    """Pick (row_tile, col_tile) that exactly divide (n_rows, n_cols).

    Prefers a single full-extent tile when it fits the per-operand budget, then the
    widest lane-aligned column tile, then the tallest sublane-aligned row group.
    """
    gran = max(8, 32 // itemsize)          # 8 rows (f32), 16 (bf16), 32 (int8/fp8)

    # Whole array fits in one tile -> no grid loop at all.
    if n_rows * n_cols * itemsize <= tile_budget:
        return n_rows, n_cols

    min_rows = min(n_rows, gran)
    # Column tile: keep the full width if it fits with a minimal row group, or if the
    # width can't be lane-tiled anyway (full extent is always a legal block dim).
    if n_cols * itemsize * min_rows <= tile_budget or n_cols % 128 != 0:
        tc = n_cols
    else:
        col_budget = max(128, tile_budget // (min_rows * itemsize))
        tc = (min(col_budget, n_cols) // 128) * 128
        while tc >= 128 and n_cols % tc != 0:
            tc -= 128
        if tc < 128:
            tc = n_cols

    # Row tile: tallest sublane-aligned divisor of n_rows within the budget.
    max_rows = max(1, tile_budget // (tc * itemsize))
    if n_rows <= max_rows:
        rb = n_rows
    else:
        rb = (max_rows // gran) * gran
        while rb >= gran and n_rows % rb != 0:
            rb -= gran
        if rb < gran:
            rb = n_rows                    # no aligned divisor; full batch is still legal
    return rb, tc


@partial(jax.jit, static_argnames=("donate_x", "tile_budget"))
def scaled_positional_encoding(x: jnp.ndarray, alpha: jnp.ndarray, pe_table: jnp.ndarray,
                               donate_x: bool = False,
                               tile_budget: int = 2 * 1024 * 1024) -> jnp.ndarray:
    """x: (B, T, D) float dtype; alpha: (1,) f32; pe_table: (max_len, D) f32."""
    B, T, D = x.shape
    n_cols = T * D

    x2 = x.reshape(B, n_cols)                        # lane-dense 2-D view (bitcast under jit)
    pe2 = pe_table[:T, :].reshape(1, n_cols)         # keep f32; broadcast over batch in-kernel

    itemsize = jnp.dtype(x.dtype).itemsize
    rb, tc = _pick_tiles(B, n_cols, itemsize, tile_budget)
    grid = (n_cols // tc, B // rb)                   # rows innermost -> pe block stays resident

    total_bytes = B * n_cols * itemsize
    cost = pl.CostEstimate(flops=2 * B * n_cols, transcendentals=0,
                           bytes_accessed=2 * total_bytes + n_cols * 4)

    out2 = pl.pallas_call(
        _scaled_pe_kernel,
        out_shape=jax.ShapeDtypeStruct((B, n_cols), x.dtype),
        grid_spec=pltpu.PrefetchScalarGridSpec(
            num_scalar_prefetch=0,
            grid=grid,
            in_specs=[
                pl.BlockSpec(memory_space=pltpu.SMEM),          # alpha scalar in SMEM
                pl.BlockSpec((rb, tc), lambda c, r: (r, c)),    # x tile
                pl.BlockSpec((1, tc), lambda c, r: (0, c)),     # pe row; re-DMA only per new c
            ],
            out_specs=pl.BlockSpec((rb, tc), lambda c, r: (r, c)),
        ),
        compiler_params=pltpu.CompilerParams(
            dimension_semantics=("parallel", "parallel")),
        cost_estimate=cost,
        # Only beneficial when the caller actually donates x's buffer; otherwise XLA would
        # insert a defensive copy, so the alias is opt-in.
        input_output_aliases=({1: 0} if donate_x else {}),
    )(alpha, x2, pe2)

    # TODO(synk): training-mode dropout not implemented; eval-mode dropout is the identity.
    return out2.reshape(B, T, D)


if __name__ == "__main__":
    # Module config: d_model=32, dropout_rate=0.1 (eval -> identity), max_len=5000
    d_model = 32
    max_len = 5000
    batch, time = 2, 8

    key = jax.random.PRNGKey(0)
    x = jax.random.normal(key, (batch, time, d_model), dtype=jnp.float32)

    # Deterministic parameter init: alpha = 1.0 (matches nn.Parameter(torch.tensor(1.0)))
    alpha = jnp.array([1.0], dtype=jnp.float32)
    pe_table = _build_pe(d_model, max_len, reverse=False)

    # --- check 1: module-sized f32 input (single-tile fast path) --------------
    out = scaled_positional_encoding(x, alpha, pe_table)
    jax.block_until_ready(out)
    ref = x + alpha[0] * pe_table[None, :time, :]
    assert out.shape == x.shape and out.dtype == x.dtype
    assert jnp.allclose(out, ref, atol=1e-6, rtol=1e-6), "mismatch vs reference (f32)"

    # --- check 2: bf16 input, non-unit alpha (f32 add in-kernel, cast on store) ----
    alpha2 = jnp.array([1.5], dtype=jnp.float32)
    x_bf16 = x.astype(jnp.bfloat16)
    out_bf16 = scaled_positional_encoding(x_bf16, alpha2, pe_table)
    jax.block_until_ready(out_bf16)
    ref_bf16 = (x_bf16.astype(jnp.float32)
                + alpha2[0] * pe_table[None, :time, :]).astype(jnp.bfloat16)
    assert out_bf16.dtype == jnp.bfloat16
    assert jnp.allclose(out_bf16.astype(jnp.float32), ref_bf16.astype(jnp.float32),
                        atol=1e-2, rtol=1e-2), "mismatch vs reference (bf16)"

    # --- check 3: multi-column-tile path (small shape, reduced tile budget) ---
    B2, T2, D2 = 8, 64, 256          # n_cols = 16384 -> four 4096-wide column tiles @128 KiB
    x_big = jax.random.normal(jax.random.PRNGKey(1), (B2, T2, D2), dtype=jnp.float32)
    pe_big = _build_pe(D2, 512, reverse=False)
    out_big = scaled_positional_encoding(x_big, alpha2, pe_big, tile_budget=128 * 1024)
    jax.block_until_ready(out_big)
    ref_big = x_big + alpha2[0] * pe_big[None, :T2, :]
    assert jnp.allclose(out_big, ref_big, atol=1e-6, rtol=1e-6), "mismatch vs reference (col-tiled)"

    # --- check 4: multi-row-tile path (small shape, reduced tile budget) ------
    B3, T3, D3 = 32, 8, 256          # n_cols = 2048 -> two 16-row tiles @128 KiB
    x_rows = jax.random.normal(jax.random.PRNGKey(2), (B3, T3, D3), dtype=jnp.float32)
    out_rows = scaled_positional_encoding(x_rows, alpha2, pe_big, tile_budget=128 * 1024)
    jax.block_until_ready(out_rows)
    ref_rows = x_rows + alpha2[0] * pe_big[None, :T3, :]
    assert jnp.allclose(out_rows, ref_rows, atol=1e-6, rtol=1e-6), "mismatch vs reference (row-tiled)"

    print("KERNEL_OK")
</pallas_src>

<mosaic_0001>
module attributes {stable_mosaic.version = 11 : i64} {
  func.func @_scaled_pe_kernel(%arg0: i32, %arg1: i32, %arg2: memref<1xf32, #tpu.memory_space<smem>>, %arg3: memref<2x256xf32, #tpu.memory_space<vmem>>, %arg4: memref<1x256xf32, #tpu.memory_space<vmem>>, %arg5: memref<2x256xf32, #tpu.memory_space<vmem>>) attributes {dimension_semantics = [#tpu.dimension_semantics<parallel>, #tpu.dimension_semantics<parallel>], iteration_bounds = array<i64: 1, 1>, scalar_prefetch = 0 : i64, scratch_operands = 0 : i64, tpu.core_type = #tpu.core_type<tc>, window_params = [{transform_indices = @transform_0, window_bounds = array<i64: 1>}, {transform_indices = @transform_1, window_bounds = array<i64: 2, 256>}, {transform_indices = @transform_2, window_bounds = array<i64: 1, 256>}, {transform_indices = @transform_3, window_bounds = array<i64: 2, 256>}]} {
    %c0 = arith.constant 0 : index
    %0 = memref.load %arg2[%c0] : memref<1xf32, #tpu.memory_space<smem>>
    %c0_0 = arith.constant 0 : index
    %c0_1 = arith.constant 0 : index
    %1 = vector.load %arg3[%c0_0, %c0_1] : memref<2x256xf32, #tpu.memory_space<vmem>>, vector<2x256xf32>
    %c0_2 = arith.constant 0 : index
    %c0_3 = arith.constant 0 : index
    %2 = vector.load %arg4[%c0_2, %c0_3] : memref<1x256xf32, #tpu.memory_space<vmem>>, vector<1x256xf32>
    %3 = vector.broadcast %0 : f32 to vector<1x256xf32>
    %4 = arith.mulf %3, %2 : vector<1x256xf32>
    %5 = vector.broadcast %4 : vector<1x256xf32> to vector<2x256xf32>
    %6 = arith.addf %1, %5 : vector<2x256xf32>
    %c0_4 = arith.constant 0 : index
    %c0_5 = arith.constant 0 : index
    %7 = vector.load %arg5[%c0_4, %c0_5] : memref<2x256xf32, #tpu.memory_space<vmem>>, vector<2x256xf32>
    tpu.vector_store %arg5[%c0_4, %c0_5], %6 {strides = array<i32>} : memref<2x256xf32, #tpu.memory_space<vmem>>, vector<2x256xf32>,
    return
  }
  func.func @transform_0(%arg0: i32, %arg1: i32) -> i32 {
    %c0_i32 = arith.constant 0 : i32
    %c0_i32_0 = arith.constant 0 : i32
    return %c0_i32 : i32
  }
  func.func @transform_1(%arg0: i32, %arg1: i32) -> (i32, i32) {
    %c0_i32 = arith.constant 0 : i32
    return %arg1, %arg0 : i32, i32
  }
  func.func @transform_2(%arg0: i32, %arg1: i32) -> (i32, i32) {
    %c0_i32 = arith.constant 0 : i32
    %c0_i32_0 = arith.constant 0 : i32
    return %c0_i32, %arg0 : i32, i32
  }
  func.func @transform_3(%arg0: i32, %arg1: i32) -> (i32, i32) {
    %c0_i32 = arith.constant 0 : i32
    return %arg1, %arg0 : i32, i32
  }
}

</mosaic_0001>

<llo_original>
// kernel: scaled_positional_encoding.1
$region0: #{scaled_positional_encoding.1}
  #allocation0 [shape = 'u32[]', space=smem, size = 0x4, offset = 0x4, fixed_abs, tag = 'smem constant byte address 0x4 - core index']
  #allocation1 [shape = 'u32[144,128]{1,0:T(1,128)}', space=vmem, size = 0x12000, scoped, tag = 'internal scratch']
  #allocation2 [shape = 'f32[1]{0:T(128)S(6)}', space=smem, size = 0x200, scoped, tag = 'scoped memory for scaled_positional_encoding.1']
  %s0 = inlined_call_operand.<no memory space> [shape: f32[1], index: 0, kind: input, shape index: {}]
  %s1 = inlined_call_operand.vmem [shape: f32[2,256], index: 1, kind: input, shape index: {}]
  %s2 = inlined_call_operand.vmem [shape: f32[1,256], index: 2, kind: input, shape index: {}]
  %s3 = inlined_call_operand.vmem [shape: f32[2,256], index: 3, kind: output, shape index: {}]
  %s4 = sld [smem:[#allocation0]]
  $region22: #{scaled_positional_encoding.1} parent=0
    _
  %s6 = ssub.s32 1, %s4
  %s7 = scalar_select 0, %s6, %s4
  %8 = sst [smem:[#allocation2]] %s0
  // Predicated region
  $region2: #{scaled_positional_encoding.1} parent=0 // pred_check
    _
  $region3: #{scaled_positional_encoding.1} parent=0 // pred_check_branch
    %10 = sbr.rel (0) target = $region5
  $region4: #{scaled_positional_encoding.1} parent=0 // pred_region
    _
  $region5: #{scaled_positional_encoding.1} parent=0 // pred_fallthru
    _
  // Predicated region
  $region6: #{scaled_positional_encoding.1} parent=0 // pred_check
    _
  $region7: #{scaled_positional_encoding.1} parent=0 // pred_check_branch
    %12 = sbr.rel (0) target = $region9
  $region8: #{scaled_positional_encoding.1} parent=0 // pred_region
    _
  $region9: #{scaled_positional_encoding.1} parent=0 // pred_fallthru
    _
  // Predicated region
  $region10: #{scaled_positional_encoding.1} parent=0 // pred_check
    _
  $region11: #{scaled_positional_encoding.1} parent=0 // pred_check_branch
    %14 = sbr.rel (0) target = $region13
  $region12: #{scaled_positional_encoding.1} parent=0 // pred_region
    _
  $region13: #{scaled_positional_encoding.1} parent=0 // pred_fallthru
    _
  %s15 = sld [smem:[#allocation2]]
  %v16 = vld [vmem:[%s1] sm:$0xf]
  %v17 = vld [vmem:[%s2] sm:$0x3]
  %v18 = vstv %s15
  %v19 = vmul.f32 %v18, %v17
  %v21 = vlaneseq
  %v22 = vshrl.u32 %v21, 7
  %v23 = vsub.s32 0, %v22
  %v24 = vrot.slane %v19, %v23
  %v25 = vlaneseq
  %v26 = vshrl.u32 %v25, 7
  %v27 = vsub.s32 1, %v26
  %v28 = vrot.slane %v19, %v27
  %v29 = vcombine.low %v24, %v28
  %v31 = vunpack.c.l.s4 1983009808
  %v32 = vunpack.c.0.s8 %v31
  %v33 = vlaneseq
  %v34 = vshrl.u32 %v33, 7
  %v35 = vsub.s32 %v32, %v34
  %v36 = vrot.slane %v29, %v35
  %v38 = vadd.f32 %v16, %v36
  %39 = vst [vmem:[%s3] sm:$0xf] %v38
  // Predicated region
  $region14: #{scaled_positional_encoding.1} parent=0 // pred_check
    _
  $region15: #{scaled_positional_encoding.1} parent=0 // pred_check_branch
    %41 = sbr.rel (0) target = $region17
  $region16: #{scaled_positional_encoding.1} parent=0 // pred_region
    _
  $region17: #{scaled_positional_encoding.1} parent=0 // pred_fallthru
    _
  // Predicated region
  $region18: #{scaled_positional_encoding.1} parent=0 // pred_check
    _
  $region19: #{scaled_positional_encoding.1} parent=0 // pred_check_branch
    %43 = sbr.rel (0) target = $region21
  $region20: #{scaled_positional_encoding.1} parent=0 // pred_region
    _
  $region21: #{scaled_positional_encoding.1} parent=0 // pred_fallthru
    _

</llo_original>
